<compile_context>
chip_gen: v7x
topology: tpu7x:2x2x1
jax: 0.10.0
libtpu: 0.0.40
codegen_flags: <defaults>
</compile_context>

<pallas_src>
import jax
import jax.numpy as jnp
from jax import lax
from jax.experimental import pallas as pl
from jax.experimental.pallas import tpu as pltpu

EPS = 1e-12  # F.normalize eps


# ----------------------------------------------------------------------------
# Kernel 1: one streaming pass over the weight -> u_new and 1/sigma.
#   grid = (IN // tk,)   (reduction axis, "arbitrary")
#   Output refs double as accumulators:
#     u_new_ref     accumulates  W @ (W^T u)          (finalized to u_new)
#     inv_sigma_ref accumulates  ||W^T u||^2          (finalized to 1/sigma)
# ----------------------------------------------------------------------------
def power_iter_kernel(u_ref, wt_ref, u_new_ref, inv_sigma_ref):
    k = pl.program_id(0)

    @pl.when(k == 0)
    def _():
        u_new_ref[...] = jnp.zeros_like(u_new_ref)
        inv_sigma_ref[...] = jnp.zeros_like(inv_sigma_ref)

    u_bf = u_ref[...].astype(jnp.bfloat16)      # (1, OUT)
    wt_k = wt_ref[...]                          # (tk, OUT) bf16

    # v_raw (this IN block) = u @ W[:, blk]  -> contract on OUT, lane-dense (1, tk)
    v_raw = lax.dot_general(
        u_bf, wt_k, (((1,), (1,)), ((), ())),
        preferred_element_type=jnp.float32)                              # (1, tk)

    # accumulate ||W^T u||^2 and the partial W @ (W^T u)
    inv_sigma_ref[...] += jnp.sum(v_raw * v_raw, axis=-1, keepdims=True)  # (1, 1)
    u_new_ref[...] += jnp.dot(
        v_raw.astype(jnp.bfloat16), wt_k,
        preferred_element_type=jnp.float32)                              # (1, OUT)

    @pl.when(k == pl.num_programs(0) - 1)
    def _():
        vnorm2 = inv_sigma_ref[...]                               # ||W^T u||^2
        # 1/max(||v_raw||, eps) == rsqrt(max(||v_raw||^2, eps^2))   (EUP rsqrt)
        inv_vnorm = lax.rsqrt(jnp.maximum(vnorm2, EPS * EPS))
        u_raw = u_new_ref[...] * inv_vnorm                        # W @ v
        unorm2 = jnp.sum(u_raw * u_raw, axis=-1, keepdims=True)
        inv_unorm = lax.rsqrt(jnp.maximum(unorm2, EPS * EPS))
        u_new = u_raw * inv_unorm                                 # normalize(W v)
        sigma = jnp.sum(u_new * u_raw, axis=-1, keepdims=True)    # u_new . (W v)
        u_new_ref[...] = u_new
        inv_sigma_ref[...] = 1.0 / sigma   # one-time scalar; keep exact precision


# ----------------------------------------------------------------------------
# Kernel 2: pipelined forward matmul  y = (x @ W^T) * (1/sigma) + b
#   grid = (B//tm, OUT//tn, IN//tk); f32 accumulator scratch; bf16 operands.
# ----------------------------------------------------------------------------
def forward_kernel(x_ref, wt_ref, sb_ref, y_ref, acc_ref):
    k = pl.program_id(2)

    @pl.when(k == 0)
    def _():
        acc_ref[...] = jnp.zeros_like(acc_ref)

    acc_ref[...] += jnp.dot(x_ref[...], wt_ref[...],
                            preferred_element_type=jnp.float32)

    @pl.when(k == pl.num_programs(2) - 1)
    def _():
        inv_sigma = sb_ref[0:1, :]   # (1, tn), broadcast of 1/sigma
        bias = sb_ref[1:2, :]        # (1, tn)
        y_ref[...] = (acc_ref[...] * inv_sigma + bias).astype(y_ref.dtype)


# ----------------------------------------------------------------------------
# Host wrapper
# ----------------------------------------------------------------------------
def spectral_norm_linear(x, w_bar, u, bias, *, tn=128, tk=128):
    """Returns (y, u_new).  x:(B,IN) f32, w_bar:(OUT,IN) f32, u:(OUT,), bias:(OUT,)."""
    B, IN = x.shape
    OUT = w_bar.shape[0]
    assert w_bar.shape == (OUT, IN)
    tm = B if B <= 128 else 128
    assert B % tm == 0 and OUT % tn == 0 and IN % tk == 0

    # Single shipped weight copy: transposed lane-dense layout, bf16.
    wt_bf = jnp.transpose(w_bar).astype(jnp.bfloat16)          # (IN, OUT)
    x_bf = x.astype(jnp.bfloat16)
    u2d = u.reshape(1, OUT).astype(jnp.float32)

    # --- kernel 1: u_new and 1/sigma in one pass over the weight -------------
    u_new, inv_sigma = pl.pallas_call(
        power_iter_kernel,
        out_shape=(jax.ShapeDtypeStruct((1, OUT), jnp.float32),
                   jax.ShapeDtypeStruct((1, 1), jnp.float32)),
        grid_spec=pltpu.PrefetchScalarGridSpec(
            num_scalar_prefetch=0,
            grid=(IN // tk,),
            in_specs=[
                pl.BlockSpec((1, OUT), lambda k: (0, 0)),     # u (resident)
                pl.BlockSpec((tk, OUT), lambda k: (k, 0)),    # weight IN-tile
            ],
            out_specs=[
                pl.BlockSpec((1, OUT), lambda k: (0, 0)),     # u_new / accumulator
                pl.BlockSpec((1, 1), lambda k: (0, 0)),       # 1/sigma / accumulator
            ],
        ),
        compiler_params=pltpu.CompilerParams(
            dimension_semantics=("arbitrary",)),
    )(u2d, wt_bf)

    # Pack [1/sigma ; bias] into one lane-dense (2, OUT) f32 operand.
    sb = jnp.concatenate(
        [jnp.broadcast_to(inv_sigma, (1, OUT)),
         bias.reshape(1, OUT).astype(jnp.float32)], axis=0)    # (2, OUT)

    # --- kernel 2: pipelined forward matmul with 1/sigma + bias epilogue -----
    y = pl.pallas_call(
        forward_kernel,
        out_shape=jax.ShapeDtypeStruct((B, OUT), jnp.float32),
        grid_spec=pltpu.PrefetchScalarGridSpec(
            num_scalar_prefetch=0,
            grid=(B // tm, OUT // tn, IN // tk),
            in_specs=[
                pl.BlockSpec((tm, tk), lambda i, j, k: (i, k)),   # x (bf16)
                pl.BlockSpec((tk, tn), lambda i, j, k: (k, j)),   # W^T (bf16)
                pl.BlockSpec((2, tn), lambda i, j, k: (0, j)),    # [1/sigma; bias]
            ],
            out_specs=pl.BlockSpec((tm, tn), lambda i, j, k: (i, j)),
            scratch_shapes=[pltpu.VMEM((tm, tn), jnp.float32)],
        ),
        compiler_params=pltpu.CompilerParams(
            dimension_semantics=("parallel", "parallel", "arbitrary")),
    )(x_bf, wt_bf, sb)

    return y, u_new.reshape(OUT)


# ----------------------------------------------------------------------------
# Pure-JAX f32 reference (mirrors the PyTorch SpectralNorm(Linear) forward)
# ----------------------------------------------------------------------------
def reference(x, w_bar, u, bias, n_iter=1):
    hp = lax.Precision.HIGHEST
    for _ in range(n_iter):
        v = jnp.dot(w_bar.T, u, precision=hp)
        v = v / jnp.maximum(jnp.linalg.norm(v), EPS)
        wv = jnp.dot(w_bar, v, precision=hp)
        u = wv / jnp.maximum(jnp.linalg.norm(wv), EPS)
    sigma = jnp.dot(u, wv, precision=hp)
    y = jnp.dot(x, (w_bar / sigma).T, precision=hp) + bias[None, :]
    return y, u


if __name__ == "__main__":
    B, IN, OUT = 8, 256, 256   # small shapes; grid = (1, 2, 2) for the forward

    key = jax.random.PRNGKey(0)
    kx, kw, ku, kb = jax.random.split(key, 4)
    x = jax.random.normal(kx, (B, IN), jnp.float32)
    w_bar = 0.1 * jax.random.normal(kw, (OUT, IN), jnp.float32)
    u0 = jax.random.normal(ku, (OUT,), jnp.float32)
    u0 = u0 / jnp.maximum(jnp.linalg.norm(u0), EPS)   # normalized init (as in _make_params)
    bias = 0.1 * jax.random.normal(kb, (OUT,), jnp.float32)

    y, u_new = spectral_norm_linear(x, w_bar, u0, bias)
    jax.block_until_ready(y)
    jax.block_until_ready(u_new)

    y_ref, u_ref = reference(x, w_bar, u0, bias)
    assert y.shape == (B, OUT)
    err_y = float(jnp.max(jnp.abs(y - y_ref)))
    err_u = float(jnp.max(jnp.abs(u_new - u_ref)))
    # Tolerances account for bf16 operands (f32 accumulation) on the MXU.
    assert jnp.allclose(y, y_ref, atol=3e-2, rtol=3e-2), err_y
    assert jnp.allclose(u_new, u_ref, atol=2e-2, rtol=2e-2), err_u
    print("KERNEL_OK")
</pallas_src>

<mosaic_0001>
module attributes {stable_mosaic.version = 11 : i64} {
  func.func @power_iter_kernel(%arg0: i32, %arg1: memref<1x256xf32, #tpu.memory_space<vmem>>, %arg2: memref<128x256xbf16, #tpu.memory_space<vmem>>, %arg3: memref<1x256xf32, #tpu.memory_space<vmem>>, %arg4: memref<1x1xf32, #tpu.memory_space<vmem>>) attributes {dimension_semantics = [#tpu.dimension_semantics<arbitrary>], iteration_bounds = array<i64: 2>, scalar_prefetch = 0 : i64, scratch_operands = 0 : i64, tpu.core_type = #tpu.core_type<tc>, window_params = [{pipeline_mode = #tpu.pipeline_mode<synchronous>, transform_indices = @transform_0, window_bounds = array<i64: 1, 256>}, {transform_indices = @transform_1, window_bounds = array<i64: 128, 256>}, {pipeline_mode = #tpu.pipeline_mode<synchronous>, transform_indices = @transform_2, window_bounds = array<i64: 1, 256>}, {pipeline_mode = #tpu.pipeline_mode<synchronous>, transform_indices = @transform_3, window_bounds = array<i64: 1, 1>}]} {
    %c0_i32 = arith.constant 0 : i32
    %0 = arith.cmpi eq, %arg0, %c0_i32 : i32
    %1 = arith.extui %0 : i1 to i32
    %c0_i32_0 = arith.constant 0 : i32
    %2 = arith.cmpi ne, %1, %c0_i32_0 : i32
    scf.if %2 {
      %cst_15 = arith.constant 0.000000e+00 : f32
      %21 = vector.broadcast %cst_15 : f32 to vector<1x256xf32>
      %c0_16 = arith.constant 0 : index
      %c0_17 = arith.constant 0 : index
      %22 = vector.load %arg3[%c0_16, %c0_17] : memref<1x256xf32, #tpu.memory_space<vmem>>, vector<1x256xf32>
      tpu.vector_store %arg3[%c0_16, %c0_17], %21 {strides = array<i32>} : memref<1x256xf32, #tpu.memory_space<vmem>>, vector<1x256xf32>,
      %cst_18 = arith.constant 0.000000e+00 : f32
      %23 = vector.broadcast %cst_18 : f32 to vector<1x1xf32>
      %c0_19 = arith.constant 0 : index
      %c0_20 = arith.constant 0 : index
      %24 = vector.load %arg4[%c0_19, %c0_20] : memref<1x1xf32, #tpu.memory_space<vmem>>, vector<1x1xf32>
      tpu.vector_store %arg4[%c0_19, %c0_20], %23 {strides = array<i32>} : memref<1x1xf32, #tpu.memory_space<vmem>>, vector<1x1xf32>,
    } else {
    }
    %c0 = arith.constant 0 : index
    %c0_1 = arith.constant 0 : index
    %3 = vector.load %arg1[%c0, %c0_1] : memref<1x256xf32, #tpu.memory_space<vmem>>, vector<1x256xf32>
    %4 = arith.truncf %3 : vector<1x256xf32> to vector<1x256xbf16>
    %c0_2 = arith.constant 0 : index
    %c0_3 = arith.constant 0 : index
    %5 = vector.load %arg2[%c0_2, %c0_3] : memref<128x256xbf16, #tpu.memory_space<vmem>>, vector<128x256xbf16>
    %cst = arith.constant dense<0.000000e+00> : vector<1x128xf32>
    %6 = tpu.matmul %4, %5, %cst {dimension_numbers = #tpu.dot_dimension_numbers<[1], [1], [0], [0], [0, 0, 1, 0], [], []>} : vector<1x256xbf16>, vector<128x256xbf16>, vector<1x128xf32> -> vector<1x128xf32>
    %c0_4 = arith.constant 0 : index
    %c0_5 = arith.constant 0 : index
    %7 = vector.load %arg4[%c0_4, %c0_5] : memref<1x1xf32, #tpu.memory_space<vmem>>, vector<1x1xf32>
    %8 = arith.mulf %6, %6 : vector<1x128xf32>
    %cst_6 = arith.constant dense<0.000000e+00> : vector<1xf32>
    %9 = vector.multi_reduction <add>, %8, %cst_6 [1] : vector<1x128xf32> to vector<1xf32>
    %10 = vector.shape_cast %9 : vector<1xf32> to vector<1x1xf32>
    %11 = arith.addf %7, %10 : vector<1x1xf32>
    %c0_7 = arith.constant 0 : index
    %c0_8 = arith.constant 0 : index
    %12 = vector.load %arg4[%c0_7, %c0_8] : memref<1x1xf32, #tpu.memory_space<vmem>>, vector<1x1xf32>
    tpu.vector_store %arg4[%c0_7, %c0_8], %11 {strides = array<i32>} : memref<1x1xf32, #tpu.memory_space<vmem>>, vector<1x1xf32>,
    %c0_9 = arith.constant 0 : index
    %c0_10 = arith.constant 0 : index
    %13 = vector.load %arg3[%c0_9, %c0_10] : memref<1x256xf32, #tpu.memory_space<vmem>>, vector<1x256xf32>
    %14 = arith.truncf %6 : vector<1x128xf32> to vector<1x128xbf16>
    %cst_11 = arith.constant dense<0.000000e+00> : vector<1x256xf32>
    %15 = tpu.matmul %14, %5, %cst_11 {dimension_numbers = #tpu.dot_dimension_numbers<[1], [0], [0], [1], [0, 0, 1, 1], [], []>} : vector<1x128xbf16>, vector<128x256xbf16>, vector<1x256xf32> -> vector<1x256xf32>
    %16 = arith.addf %13, %15 : vector<1x256xf32>
    %c0_12 = arith.constant 0 : index
    %c0_13 = arith.constant 0 : index
    %17 = vector.load %arg3[%c0_12, %c0_13] : memref<1x256xf32, #tpu.memory_space<vmem>>, vector<1x256xf32>
    tpu.vector_store %arg3[%c0_12, %c0_13], %16 {strides = array<i32>} : memref<1x256xf32, #tpu.memory_space<vmem>>, vector<1x256xf32>,
    %c1_i32 = arith.constant 1 : i32
    %18 = arith.cmpi eq, %arg0, %c1_i32 : i32
    %19 = arith.extui %18 : i1 to i32
    %c0_i32_14 = arith.constant 0 : i32
    %20 = arith.cmpi ne, %19, %c0_i32_14 : i32
    scf.if %20 {
      %c0_15 = arith.constant 0 : index
      %c0_16 = arith.constant 0 : index
      %21 = vector.load %arg4[%c0_15, %c0_16] : memref<1x1xf32, #tpu.memory_space<vmem>>, vector<1x1xf32>
      %cst_17 = arith.constant 1.000000e-24 : f32
      %22 = vector.broadcast %cst_17 : f32 to vector<1x1xf32>
      %23 = arith.maximumf %21, %22 : vector<1x1xf32>
      %24 = math.rsqrt %23 : vector<1x1xf32>
      %c0_18 = arith.constant 0 : index
      %c0_19 = arith.constant 0 : index
      %25 = vector.load %arg3[%c0_18, %c0_19] : memref<1x256xf32, #tpu.memory_space<vmem>>, vector<1x256xf32>
      %26 = vector.broadcast %24 : vector<1x1xf32> to vector<1x256xf32>
      %27 = arith.mulf %25, %26 : vector<1x256xf32>
      %28 = arith.mulf %27, %27 : vector<1x256xf32>
      %cst_20 = arith.constant dense<0.000000e+00> : vector<1xf32>
      %29 = vector.multi_reduction <add>, %28, %cst_20 [1] : vector<1x256xf32> to vector<1xf32>
      %30 = vector.shape_cast %29 : vector<1xf32> to vector<1x1xf32>
      %cst_21 = arith.constant 1.000000e-24 : f32
      %31 = vector.broadcast %cst_21 : f32 to vector<1x1xf32>
      %32 = arith.maximumf %30, %31 : vector<1x1xf32>
      %33 = math.rsqrt %32 : vector<1x1xf32>
      %34 = vector.broadcast %33 : vector<1x1xf32> to vector<1x256xf32>
      %35 = arith.mulf %27, %34 : vector<1x256xf32>
      %36 = arith.mulf %35, %27 : vector<1x256xf32>
      %cst_22 = arith.constant dense<0.000000e+00> : vector<1xf32>
      %37 = vector.multi_reduction <add>, %36, %cst_22 [1] : vector<1x256xf32> to vector<1xf32>
      %38 = vector.shape_cast %37 : vector<1xf32> to vector<1x1xf32>
      %c0_23 = arith.constant 0 : index
      %c0_24 = arith.constant 0 : index
      %39 = vector.load %arg3[%c0_23, %c0_24] : memref<1x256xf32, #tpu.memory_space<vmem>>, vector<1x256xf32>
      tpu.vector_store %arg3[%c0_23, %c0_24], %35 {strides = array<i32>} : memref<1x256xf32, #tpu.memory_space<vmem>>, vector<1x256xf32>,
      %cst_25 = arith.constant 1.000000e+00 : f32
      %40 = vector.broadcast %cst_25 : f32 to vector<1x1xf32>
      %41 = arith.divf %40, %38 : vector<1x1xf32>
      %c0_26 = arith.constant 0 : index
      %c0_27 = arith.constant 0 : index
      %42 = vector.load %arg4[%c0_26, %c0_27] : memref<1x1xf32, #tpu.memory_space<vmem>>, vector<1x1xf32>
      tpu.vector_store %arg4[%c0_26, %c0_27], %41 {strides = array<i32>} : memref<1x1xf32, #tpu.memory_space<vmem>>, vector<1x1xf32>,
    } else {
    }
    return
  }
  func.func @transform_0(%arg0: i32) -> (i32, i32) {
    %c0_i32 = arith.constant 0 : i32
    %c0_i32_0 = arith.constant 0 : i32
    %c0_i32_1 = arith.constant 0 : i32
    return %c0_i32, %c0_i32_0 : i32, i32
  }
  func.func @transform_1(%arg0: i32) -> (i32, i32) {
    %c0_i32 = arith.constant 0 : i32
    %c0_i32_0 = arith.constant 0 : i32
    return %arg0, %c0_i32 : i32, i32
  }
  func.func @transform_2(%arg0: i32) -> (i32, i32) {
    %c0_i32 = arith.constant 0 : i32
    %c0_i32_0 = arith.constant 0 : i32
    %c0_i32_1 = arith.constant 0 : i32
    return %c0_i32, %c0_i32_0 : i32, i32
  }
  func.func @transform_3(%arg0: i32) -> (i32, i32) {
    %c0_i32 = arith.constant 0 : i32
    %c0_i32_0 = arith.constant 0 : i32
    %c0_i32_1 = arith.constant 0 : i32
    return %c0_i32, %c0_i32_0 : i32, i32
  }
}

</mosaic_0001>

<llo_original>
// kernel: tpu_custom_call.1
$region0: #{tpu_custom_call.1}
  #allocation0 [shape = 'u32[]', space=smem, size = 0x4, offset = 0x4, fixed_abs, tag = 'smem constant byte address 0x4 - core index']
  #allocation1 [shape = 'u32[144,128]{1,0:T(1,128)}', space=vmem, size = 0x12000, scoped, tag = 'internal scratch']
  %s0 = inlined_call_operand.hbm [shape: f32[1,256], index: 0, kind: input, shape index: {}]
  %s1 = inlined_call_operand.hbm [shape: bf16[256,256], index: 1, kind: input, shape index: {}]
  %s2 = inlined_call_operand.hbm [shape: f32[1,256], index: 2, kind: output, shape index: {0}]
  %s3 = inlined_call_operand.hbm [shape: f32[1,1], index: 3, kind: output, shape index: {1}]
  %4 = xla_tuple %s2, %s3
  %s5 = sld [smem:[#allocation0]]
  $region65: #{tpu_custom_call.1} parent=0
    _
  %s7 = ssub.s32 1, %s5
  %s8 = scalar_select 0, %s7, %s5
  $region1: #{tpu_custom_call.1} parent=0
    #allocation2 [shape = 'u8[1024]{0}', space=vmem, size = 0x400, scoped, tag = 'input window, operand 0, single buffered']
    #allocation3 [shape = 's32[2]{0}', space=sflag, size = 0x8, scoped, tag = 'scoped memory for tpu_custom_call.1']
    #allocation4 [shape = 's32[2]{0}', space=sflag, size = 0x8, scoped, tag = 'scoped memory for tpu_custom_call.1']
    #allocation5 [shape = 'u8[131072]{0}', space=vmem, size = 0x20000, scoped, tag = 'input window, operand 1']
    #allocation6 [shape = 's32[2]{0}', space=sflag, size = 0x8, scoped, tag = 'scoped memory for tpu_custom_call.1']
    #allocation7 [shape = 'u8[1024]{0}', space=vmem, size = 0x400, scoped, tag = 'output window, operand 0, single buffered']
    #allocation8 [shape = 'u8[512]{0}', space=vmem, size = 0x400, scoped, tag = 'output window, operand 1, single buffered']
    #allocation9 [shape = 's32[1]{0}', space=sflag, size = 0x4, scoped, tag = 'scoped memory for tpu_custom_call.1']
    %9 = vsyncpa [#allocation3], 0
    %10 = vsyncpa [#allocation6], 0
    %s11 = scalar_lea.sflag [#allocation6], 1
    %12 = vsyncpa %s11, 0
    %13 = vsyncpa [#allocation4], 0
    %14 = vsyncpa [#allocation9], 0
    loop: start=0, step=1, limit=4
    $region2: #{tpu_custom_call.1} parent=1 // loop_pre_header
      _
    $region3: #{tpu_custom_call.1} parent=1 // loop_header
      %s16 = sphi 0, %s20
      %p17 = scmp.ge.s32.totalorder %s16, 4
      %s24 = sphi 0, %s24
      %s26 = sphi 0, %s24
      %s27 = sphi 0, %s26
      %s41 = sphi 0, %s27
      %s47 = sphi 0, %s49
      %s50 = sphi 0, %s47
      %s51 = sphi 0, %s50
      %s67 = sphi 0, %s51
      %s71 = sphi 0, %s71
      %s73 = sphi 0, %s71
      %s74 = sphi 0, %s73
      %s88 = sphi 0, %s74
      %s92 = sphi 0, %s92
      %s94 = sphi 0, %s92
      %s95 = sphi 0, %s94
      %s109 = sphi 0, %s95
    $region4: #{tpu_custom_call.1} parent=1 // loop_header_branch
      %19 = sbr.rel (%p17) target = $region8
    $region5: #{tpu_custom_call.1} parent=1 // loop_body
      %s21 = ssub.s32 %s16, 1
      %s22 = ssub.s32 %s16, 2
      %s23 = sadd.s32 %s16, 1
      %s25 = sadd.s32 %s24, 1
      %p28 = scmp.eq.s32.totalorder %s16, 1
      %p29 = scmp.ne.s32.totalorder %s24, %s26
      %p30 = scmp.eq.s32.totalorder %s16, 0
      %p31 = por %p29, %p30
      %p32 = scmp.ne.s32.totalorder %s24, %s26
      %p33 = scmp.eq.s32.totalorder %s21, 1
      %p34 = por %p32, %p33
      %p35 = scmp.ne.s32.totalorder %s26, %s27
      %p36 = scmp.eq.s32.totalorder %s21, 0
      %p37 = por %p35, %p36
      %p38 = scmp.ne.s32.totalorder %s26, %s27
      %p39 = scmp.eq.s32.totalorder %s22, 1
      %p40 = por %p38, %p39
      %p42 = scmp.ne.s32.totalorder %s27, %s41
      %p43 = scmp.eq.s32.totalorder %s22, 0
      %p44 = por %p42, %p43
      %s45 = ssub.s32 %s16, %s23
      %p46 = scmp.eq.s32.totalorder %s45, 0
      %s48 = sadd.s32 %s47, 1
      %s49 = scalar_select %p46, %s47, %s48
      %p52 = pneg %p46
      %p53 = scmp.eq.s32.totalorder %s16, 1
      %p54 = por %p52, %p53
      %p55 = scmp.ne.s32.totalorder %s47, %s50
      %p56 = scmp.eq.s32.totalorder %s16, 0
      %p57 = por %p55, %p56
      %p58 = scmp.ne.s32.totalorder %s47, %s50
      %p59 = scmp.eq.s32.totalorder %s21, 1
      %p60 = por %p58, %p59
      %p61 = scmp.ne.s32.totalorder %s50, %s51
      %p62 = scmp.eq.s32.totalorder %s21, 0
      %p63 = por %p61, %p62
      %p64 = scmp.ne.s32.totalorder %s50, %s51
      %p65 = scmp.eq.s32.totalorder %s22, 1
      %p66 = por %p64, %p65
      %p68 = scmp.ne.s32.totalorder %s51, %s67
      %p69 = scmp.eq.s32.totalorder %s22, 0
      %p70 = por %p68, %p69
      %s72 = sadd.s32 %s71, 1
      %p75 = scmp.eq.s32.totalorder %s16, 1
      %p76 = scmp.ne.s32.totalorder %s71, %s73
      %p77 = scmp.eq.s32.totalorder %s16, 0
      %p78 = por %p76, %p77
      %p79 = scmp.ne.s32.totalorder %s71, %s73
      %p80 = scmp.eq.s32.totalorder %s21, 1
      %p81 = por %p79, %p80
      %p82 = scmp.ne.s32.totalorder %s73, %s74
      %p83 = scmp.eq.s32.totalorder %s21, 0
      %p84 = por %p82, %p83
      %p85 = scmp.ne.s32.totalorder %s73, %s74
      %p86 = scmp.eq.s32.totalorder %s22, 1
      %p87 = por %p85, %p86
      %p89 = scmp.ne.s32.totalorder %s74, %s88
      %p90 = scmp.eq.s32.totalorder %s22, 0
      %p91 = por %p89, %p90
      %s93 = sadd.s32 %s92, 1
      %p96 = scmp.eq.s32.totalorder %s16, 1
      %p97 = scmp.ne.s32.totalorder %s92, %s94
      %p98 = scmp.eq.s32.totalorder %s16, 0
      %p99 = por %p97, %p98
      %p100 = scmp.ne.s32.totalorder %s92, %s94
      %p101 = scmp.eq.s32.totalorder %s21, 1
      %p102 = por %p100, %p101
      %p103 = scmp.ne.s32.totalorder %s94, %s95
      %p104 = scmp.eq.s32.totalorder %s21, 0
      %p105 = por %p103, %p104
      %p106 = scmp.ne.s32.totalorder %s94, %s95
      %p107 = scmp.eq.s32.totalorder %s22, 1
      %p108 = por %p106, %p107
      %p110 = scmp.ne.s32.totalorder %s95, %s109
      %p111 = scmp.eq.s32.totalorder %s22, 0
      %p112 = por %p110, %p111
      %p113 = scmp.le.s32.totalorder 1, %s16
      %p114 = scmp.lt.s32.totalorder %s16, 3
      %p115 = pnand %p113, %p114
      %p116 = pneg %p115
      // Predicated region
      $region9: #{tpu_custom_call.1} parent=5 // pred_check
        _
      $region10: #{tpu_custom_call.1} parent=5 // pred_check_branch
        %118 = sbr.rel (%p115) target = $region12
      $region11: #{tpu_custom_call.1} parent=5 // pred_region
        %s119 = ssub.s32 %s16, 1
        // Predicated region
        $region13: #{tpu_custom_call.1} parent=11 // pred_check
          %p120 = pneg %p37
        $region14: #{tpu_custom_call.1} parent=11 // pred_check_branch
          %122 = sbr.rel (%p120) target = $region16
        $region15: #{tpu_custom_call.1} parent=11 // pred_region
          %s124 = ssub.s32 32, 32
          %125 = vsyncadd [#allocation3], %s124
          %s127 = sshll.u32 [#allocation2], 4
          %s128 = int_to_ptr.vmem [resolvable:$true] %s127
          %130 = dma.hbm_to_vmem [thread:$0]  %s0, 32, %s128, [#allocation3]
        $region16: #{tpu_custom_call.1} parent=11 // pred_fallthru
          _
      $region12: #{tpu_custom_call.1} parent=5 // pred_fallthru
        _
      %p131 = scmp.lt.s32.totalorder %s16, 2
      // Predicated region
      $region17: #{tpu_custom_call.1} parent=5 // pred_check
        %p132 = pneg %p131
      $region18: #{tpu_custom_call.1} parent=5 // pred_check_branch
        %134 = sbr.rel (%p132) target = $region20
      $region19: #{tpu_custom_call.1} parent=5 // pred_region
        // Predicated region
        $region21: #{tpu_custom_call.1} parent=19 // pred_check
          %p135 = pneg %p57
        $region22: #{tpu_custom_call.1} parent=19 // pred_check_branch
          %137 = sbr.rel (%p135) target = $region24
        $region23: #{tpu_custom_call.1} parent=19 // pred_region
          %s138 = sand.u32 %s47, 1
          %s139 = scalar_lea.sflag [#allocation6], %s138
          %s140 = sand.u32 %s47, 1
          %s141 = smul.addr %s140, 128
          %s142 = scalar_lea.vmem [#allocation5], %s141
          %s143 = smul.u32 16, %s16
          %s145 = ssub.s32 2048, 2048
          %146 = vsyncadd %s139, %s145
          %s147 = smul.addr %s143, 2
          %s148 = smul.addr %s147, 64
          %s149 = scalar_lea.hbm %s1, %s148
          %s150 = sshll.u32 %s142, 4
          %s151 = int_to_ptr.vmem [resolvable:$true] %s150
          %156 = dma.hbm_to_vmem [thread:$0]  %s149, 2048, %s151, %s139, 128, 128, 8
        $region24: #{tpu_custom_call.1} parent=19 // pred_fallthru
          _
      $region20: #{tpu_custom_call.1} parent=5 // pred_fallthru
        _
      %p157 = scmp.le.s32.totalorder 1, %s16
      %p158 = scmp.lt.s32.totalorder %s16, 3
      %p159 = pnand %p157, %p158
      %p160 = pneg %p159
      // Predicated region
      $region25: #{tpu_custom_call.1} parent=5 // pred_check
        _
      $region26: #{tpu_custom_call.1} parent=5 // pred_check_branch
        %162 = sbr.rel (%p159) target = $region28
      $region27: #{tpu_custom_call.1} parent=5 // pred_region
        %s163 = ssub.s32 %s16, 1
        // Predicated region
        $region29: #{tpu_custom_call.1} parent=27 // pred_check
          %p164 = pneg %p37
        $region30: #{tpu_custom_call.1} parent=27 // pred_check_branch
          %166 = sbr.rel (%p164) target = $region32
        $region31: #{tpu_custom_call.1} parent=27 // pred_region
          %167 = dma.done [#allocation3], 32
        $region32: #{tpu_custom_call.1} parent=27 // pred_fallthru
          _
        %s168 = sand.u32 %s50, 1
        %s169 = scalar_lea.sflag [#allocation6], %s168
        %s170 = sand.u32 %s50, 1
        %s171 = smul.addr %s170, 128
        %s172 = scalar_lea.vmem [#allocation5], %s171
        // Predicated region
        $region33: #{tpu_custom_call.1} parent=27 // pred_check
          %p173 = pneg %p63
        $region34: #{tpu_custom_call.1} parent=27 // pred_check_branch
          %175 = sbr.rel (%p173) target = $region36
        $region35: #{tpu_custom_call.1} parent=27 // pred_region
          %176 = dma.done %s169, 2048
        $region36: #{tpu_custom_call.1} parent=27 // pred_fallthru
          _
        %p177 = pneg %p37
        %p178 = pneg %p34
        %s179 = sand.u32 %s50, 1
        %s180 = scalar_lea.sflag [#allocation6], %s179
        %s181 = sand.u32 %s50, 1
        %s182 = smul.addr %s181, 128
        %s183 = scalar_lea.vmem [#allocation5], %s182
        %p184 = pneg %p63
        %p185 = pneg %p60
        %p186 = pneg %p84
        %p187 = pneg %p81
        %p188 = pneg %p105
        %p189 = pneg %p102
        %s190 = smul.u32 16, %s21
        %p192 = scmp.eq.s32.totalorder %s21, 0
        // Predicated region
        $region37: #{tpu_custom_call.1} parent=27 // pred_check
          %p193 = pneg %p192
        $region38: #{tpu_custom_call.1} parent=27 // pred_check_branch
          %195 = sbr.rel (%p193) target = $region40
        $region39: #{tpu_custom_call.1} parent=27 // pred_region
          %v196 = vlaneseq
          %vm197 = vcmp.ge.s32.totalorder %v196, 0
          %vm198 = vcmp.lt.s32.totalorder %v196, 256
          %vm199 = vmand %vm197, %vm198
          %200 = vst.msk [vmem:[#allocation7] sm:$0x3] %vm199, 0.0
          %vm201 = vcmask 0
          %202 = vst.msk [vmem:[#allocation8] sm:$0x1] %vm201, 0.0
        $region40: #{tpu_custom_call.1} parent=27 // pred_fallthru
          _
        %v203 = vld [vmem:[#allocation2] sm:$0x3]
        %v205 = vlaneseq
        %v206 = vshrl.u32 %v205, 7
        %v207 = vsub.s32 0, %v206
        %v208 = vrot.slane %v203, %v207
        %v209 = vlaneseq
        %v210 = vshrl.u32 %v209, 7
        %v211 = vsub.s32 1, %v210
        %v212 = vrot.slane %v203, %v211
        %v215 = vpack.c.bf16 %v208, %v208
        %v216 = vpack.c.bf16 %v212, %v212
        %v217 = vld [vmem:[%s172] sm:$0xff]
        %v218 = vld [vmem:[%s172 + $0x8] sm:$0xff]
        %v219 = vld [vmem:[%s172 + $0x10] sm:$0xff]
        %v220 = vld [vmem:[%s172 + $0x18] sm:$0xff]
        %v221 = vld [vmem:[%s172 + $0x20] sm:$0xff]
        %v222 = vld [vmem:[%s172 + $0x28] sm:$0xff]
        %v223 = vld [vmem:[%s172 + $0x30] sm:$0xff]
        %v224 = vld [vmem:[%s172 + $0x38] sm:$0xff]
        %v225 = vld [vmem:[%s172 + $0x40] sm:$0xff]
        %v226 = vld [vmem:[%s172 + $0x48] sm:$0xff]
        %v227 = vld [vmem:[%s172 + $0x50] sm:$0xff]
        %v228 = vld [vmem:[%s172 + $0x58] sm:$0xff]
        %v229 = vld [vmem:[%s172 + $0x60] sm:$0xff]
        %v230 = vld [vmem:[%s172 + $0x68] sm:$0xff]
        %v231 = vld [vmem:[%s172 + $0x70] sm:$0xff]
        %v232 = vld [vmem:[%s172 + $0x78] sm:$0xff]
        %v249 = vunpack.c.l.b16 %v217
        %v250 = vunpack.c.h.b16 %v217
        %v251 = vunpack.c.l.b16 %v218
        %v252 = vunpack.c.h.b16 %v218
        %v253 = vunpack.c.l.b16 %v219
        %v254 = vunpack.c.h.b16 %v219
        %v255 = vunpack.c.l.b16 %v220
        %v256 = vunpack.c.h.b16 %v220
        %v257 = vunpack.c.l.b16 %v221
        %v258 = vunpack.c.h.b16 %v221
        %v259 = vunpack.c.l.b16 %v222
        %v260 = vunpack.c.h.b16 %v222
        %v261 = vunpack.c.l.b16 %v223
        %v262 = vunpack.c.h.b16 %v223
        %v263 = vunpack.c.l.b16 %v224
        %v264 = vunpack.c.h.b16 %v224
        %v265 = vunpack.c.l.b16 %v225
        %v266 = vunpack.c.h.b16 %v225
        %v267 = vunpack.c.l.b16 %v226
        %v268 = vunpack.c.h.b16 %v226
        %v269 = vunpack.c.l.b16 %v227
        %v270 = vunpack.c.h.b16 %v227
        %v271 = vunpack.c.l.b16 %v228
        %v272 = vunpack.c.h.b16 %v228
        %v273 = vunpack.c.l.b16 %v229
        %v274 = vunpack.c.h.b16 %v229
        %v275 = vunpack.c.l.b16 %v230
        %v276 = vunpack.c.h.b16 %v230
        %v277 = vunpack.c.l.b16 %v231
        %v278 = vunpack.c.h.b16 %v231
        %v279 = vunpack.c.l.b16 %v232
        %v280 = vunpack.c.h.b16 %v232
        %v281 = vpack.c.b16 %v251, %v249
        %v282 = vpack.c.b16 %v252, %v250
        %v283 = vpack.c.b16 %v255, %v253
        %v284 = vpack.c.b16 %v256, %v254
        %v285 = vpack.c.b16 %v259, %v257
        %v286 = vpack.c.b16 %v260, %v258
        %v287 = vpack.c.b16 %v263, %v261
        %v288 = vpack.c.b16 %v264, %v262
        %v289 = vpack.c.b16 %v267, %v265
        %v290 = vpack.c.b16 %v268, %v266
        %v291 = vpack.c.b16 %v271, %v269
        %v292 = vpack.c.b16 %v272, %v270
        %v293 = vpack.c.b16 %v275, %v273
        %v294 = vpack.c.b16 %v276, %v274
        %v295 = vpack.c.b16 %v279, %v277
        %v296 = vpack.c.b16 %v280, %v278
        %313 = vmatprep.subr.bf16.mxu0 %v282
        %314 = vmatpush1.bf16.xpose.msra.mxu0 %v281
        %315 = vmatprep.subr.bf16.mxu0 %v284
        %316 = vmatpush1.bf16.xpose.msra.mxu0 %v283
        %317 = vmatprep.subr.bf16.mxu0 %v286
        %318 = vmatpush1.bf16.xpose.msra.mxu0 %v285
        %319 = vmatprep.subr.bf16.mxu0 %v288
        %320 = vmatpush1.bf16.xpose.msra.mxu0 %v287
        %321 = vmatprep.subr.bf16.mxu0 %v290
        %322 = vmatpush1.bf16.xpose.msra.mxu0 %v289
        %323 = vmatprep.subr.bf16.mxu0 %v292
        %324 = vmatpush1.bf16.xpose.msra.mxu0 %v291
        %325 = vmatprep.subr.bf16.mxu0 %v294
        %326 = vmatpush1.bf16.xpose.msra.mxu0 %v293
        %327 = vmatprep.subr.bf16.mxu0 %v296
        %328 = vmatpush1.bf16.xpose.msra.mxu0 %v295
        %329 = vmatprep.subr.bf16.mxu0 0
        %330 = vmatpush1.bf16.xpose.msra.mxu0 0
        %331 = vmatprep.subr.bf16.mxu0 0
        %332 = vmatpush1.bf16.xpose.msra.mxu0 0
        %333 = vmatprep.subr.bf16.mxu0 0
        %334 = vmatpush1.bf16.xpose.msra.mxu0 0
        %335 = vmatprep.subr.bf16.mxu0 0
        %336 = vmatpush1.bf16.xpose.msra.mxu0 0
        %337 = vmatprep.subr.bf16.mxu0 0
        %338 = vmatpush1.bf16.xpose.msra.mxu0 0
        %339 = vmatprep.subr.bf16.mxu0 0
        %340 = vmatpush1.bf16.xpose.msra.mxu0 0
        %341 = vmatprep.subr.bf16.mxu0 0
        %342 = vmatpush1.bf16.xpose.msra.mxu0 0
        %343 = vmatprep.subr.bf16.mxu0 0
        %344 = vmatpush1.bf16.xpose.msra.mxu0 0
        %345 = vmatprep.mubr.bf16.mxu0 %v216
        %346 = vmatmul.mubr.bf16.gmra.mrb[0].mxu0 %v215
        %v347 = vpop.f32.mrb[0].mxu0
        %v348 = vadd.f32 0.0, %v347
        %v349 = vpop.f32.mrb[0].mxu0
        %v350 = vpop.f32.mrb[0].mxu0
        %v351 = vpop.f32.mrb[0].mxu0
        %352 = vdwg.mxu0
        %v353 = vld [vmem:[#allocation8] sm:$0x1]
        %v354 = vmul.f32 %v348, %v348
        %vm355 = vcmask 1040384
        %v356 = vsel %vm355, %v354, 0.0
        %357 = vadd.xlane.f32.xlu0 %v356
        %v358 = vpop.xlane.xlu0 %357
        %v359 = vadd.f32 %v353, %v358
        %vm360 = vcmask 0
        %361 = vst.msk [vmem:[#allocation8] sm:$0x1] %vm360, %v359
        %v362 = vld [vmem:[#allocation7] sm:$0x3]
        %v363 = vpack.c.bf16 %v348, %v348
        %364 = vmatprep.subr.bf16.mxu0 %v282
        %365 = vmatpush1.bf16.msra.mxu0 %v281
        %366 = vmatprep.subr.bf16.mxu0 %v284
        %367 = vmatpush1.bf16.msra.mxu0 %v283
        %368 = vmatprep.subr.bf16.mxu0 %v286
        %369 = vmatpush1.bf16.msra.mxu0 %v285
        %370 = vmatprep.subr.bf16.mxu0 %v288
        %371 = vmatpush1.bf16.msra.mxu0 %v287
        %372 = vmatprep.subr.bf16.mxu0 %v290
        %373 = vmatpush1.bf16.msra.mxu0 %v289
        %374 = vmatprep.subr.bf16.mxu0 %v292
        %375 = vmatpush1.bf16.msra.mxu0 %v291
        %376 = vmatprep.subr.bf16.mxu0 %v294
        %377 = vmatpush1.bf16.msra.mxu0 %v293
        %378 = vmatprep.subr.bf16.mxu0 %v296
        %379 = vmatpush1.bf16.msra.mxu0 %v295
        %380 = vmatprep.subr.bf16.mxu0 0
        %381 = vmatpush1.bf16.msra.mxu0 0
        %382 = vmatprep.subr.bf16.mxu0 0
        %383 = vmatpush1.bf16.msra.mxu0 0
        %384 = vmatprep.subr.bf16.mxu0 0
        %385 = vmatpush1.bf16.msra.mxu0 0
        %386 = vmatprep.subr.bf16.mxu0 0
        %387 = vmatpush1.bf16.msra.mxu0 0
        %388 = vmatprep.subr.bf16.mxu0 0
        %389 = vmatpush1.bf16.msra.mxu0 0
        %390 = vmatprep.subr.bf16.mxu0 0
        %391 = vmatpush1.bf16.msra.mxu0 0
        %392 = vmatprep.subr.bf16.mxu0 0
        %393 = vmatpush1.bf16.msra.mxu0 0
        %394 = vmatprep.subr.bf16.mxu0 0
        %395 = vmatpush1.bf16.msra.mxu0 0
        %396 = vmatprep.mubr.bf16.mxu0 0
        %397 = vmatmul.mubr.bf16.gmra.mrb[0].mxu0 %v363
        %v398 = vpop.f32.mrb[0].mxu0
        %v399 = vadd.f32 0.0, %v398
        %v400 = vpop.f32.mrb[0].mxu0
        %v401 = vadd.f32 0.0, %v400
        %v402 = vpop.f32.mrb[0].mxu0
        %v403 = vpop.f32.mrb[0].mxu0
        %404 = vdwg.mxu0
        %v407 = vcombine.low %v399, %v401
        %v409 = vunpack.c.l.s4 1966171168
        %v410 = vunpack.c.0.s8 %v409
        %v411 = vlaneseq
        %v412 = vshrl.u32 %v411, 7
        %v413 = vsub.s32 %v410, %v412
        %v414 = vrot.slane %v407, %v413
        %v416 = vunpack.c.l.s4 1966171168
        %v417 = vunpack.c.0.s8 %v416
        %v418 = vlaneseq
        %v419 = vshrl.u32 %v418, 7
        %v420 = vsub.s32 %v417, %v419
        %v421 = vrot.slane %v414, %v420
        %v423 = vadd.f32 %v362, %v421
        %v424 = vlaneseq
        %vm425 = vcmp.ge.s32.totalorder %v424, 0
        %vm426 = vcmp.lt.s32.totalorder %v424, 256
        %vm427 = vmand %vm425, %vm426
        %428 = vst.msk [vmem:[#allocation7] sm:$0x3] %vm427, %v423
        %p429 = scmp.eq.s32.totalorder %s21, 1
        // Predicated region
        $region41: #{tpu_custom_call.1} parent=27 // pred_check
          %p430 = pneg %p429
        $region42: #{tpu_custom_call.1} parent=27 // pred_check_branch
          %432 = sbr.rel (%p430) target = $region44
        $region43: #{tpu_custom_call.1} parent=27 // pred_region
          %v433 = vld [vmem:[#allocation8] sm:$0x1]
          %v434 = vmax.f32 %v433, 1e-24
          %v435 = vrsqrt.pop %v434
          %v436 = vld [vmem:[#allocation7] sm:$0x3]
          %438 = vset.pattern.permute.xlu0 0
          %439 = vperm.xlu0 %438, %v435
          %v440 = vpop.permute.xlu0 %439
          %v442 = vlaneseq
          %v443 = vshrl.u32 %v442, 7
          %v444 = vsub.s32 0, %v443
          %v445 = vrot.slane %v440, %v444
          %v446 = vmul.f32 %v436, %v445
          %v447 = vmul.f32 %v446, %v446
          %v449 = vlaneseq
          %v450 = vshrl.u32 %v449, 7
          %v451 = vsub.s32 0, %v450
          %v452 = vrot.slane %v447, %v451
          %v453 = vlaneseq
          %v454 = vshrl.u32 %v453, 7
          %v455 = vsub.s32 1, %v454
          %v456 = vrot.slane %v447, %v455
          %v459 = vsel %vm355, %v452, 0.0
          %v460 = vsel %vm355, %v456, 0.0
          %v461 = vadd.f32 %v459, %v460
          %462 = vadd.xlane.f32.xlu0 %v461
          %v463 = vpop.xlane.xlu0 %462
          %v464 = vmax.f32 %v463, 1e-24
          %v465 = vrsqrt.pop %v464
          %v467 = vlaneseq
          %v468 = vshrl.u32 %v467, 7
          %v469 = vsub.s32 0, %v468
          %v470 = vrot.slane %v465, %v469
          %v472 = vmul.f32 %v446, %v470
          %v473 = vmul.f32 %v472, %v446
          %v475 = vlaneseq
          %v476 = vshrl.u32 %v475, 7
          %v477 = vsub.s32 0, %v476
          %v478 = vrot.slane %v473, %v477
          %v479 = vlaneseq
          %v480 = vshrl.u32 %v479, 7
          %v481 = vsub.s32 1, %v480
          %v482 = vrot.slane %v473, %v481
          %v485 = vsel %vm355, %v478, 0.0
          %v486 = vsel %vm355, %v482, 0.0
          %v487 = vadd.f32 %v485, %v486
          %488 = vadd.xlane.f32.xlu0 %v487
          %v489 = vpop.xlane.xlu0 %488
          %490 = vst.msk [vmem:[#allocation7] sm:$0x3] %vm427, %v472
          %v491 = vrcp.pop %v489
          %v492 = vmul.f32 1.0, %v491
          %493 = vst.msk [vmem:[#allocation8] sm:$0x1] %vm360, %v492
        $region44: #{tpu_custom_call.1} parent=27 // pred_fallthru
          _
        // Predicated region
        $region45: #{tpu_custom_call.1} parent=27 // pred_check
          %p494 = pneg %p81
        $region46: #{tpu_custom_call.1} parent=27 // pred_check_branch
          %496 = sbr.rel (%p494) target = $region48
        $region47: #{tpu_custom_call.1} parent=27 // pred_region
          %s498 = ssub.s32 32, 32
          %499 = vsyncadd [#allocation4], %s498
          %s501 = sshll.u32 [#allocation7], 4
          %s502 = int_to_ptr.vmem [resolvable:$true] %s501
          %504 = dma.vmem_to_hbm [thread:$0]  %s502, 32, %s2, [#allocation4]
        $region48: #{tpu_custom_call.1} parent=27 // pred_fallthru
          _
        // Predicated region
        $region49: #{tpu_custom_call.1} parent=27 // pred_check
          %p505 = pneg %p102
        $region50: #{tpu_custom_call.1} parent=27 // pred_check_branch
          %507 = sbr.rel (%p505) target = $region52
        $region51: #{tpu_custom_call.1} parent=27 // pred_region
          %s509 = ssub.s32 16, 16
          %510 = vsyncadd [#allocation9], %s509
          %s512 = sshll.u32 [#allocation8], 4
          %s513 = int_to_ptr.vmem [resolvable:$true] %s512
          %515 = dma.vmem_to_hbm [thread:$0]  %s513, 16, %s3, [#allocation9]
        $region52: #{tpu_custom_call.1} parent=27 // pred_fallthru
          _
        // Predicated region
        $region53: #{tpu_custom_call.1} parent=27 // pred_check
          %p516 = pneg %p81
        $region54: #{tpu_custom_call.1} parent=27 // pred_check_branch
          %518 = sbr.rel (%p516) target = $region56
        $region55: #{tpu_custom_call.1} parent=27 // pred_region
          %519 = dma.done [#allocation4], 32
        $region56: #{tpu_custom_call.1} parent=27 // pred_fallthru
          _
        // Predicated region
        $region57: #{tpu_custom_call.1} parent=27 // pred_check
          %p520 = pneg %p102
        $region58: #{tpu_custom_call.1} parent=27 // pred_check_branch
          %522 = sbr.rel (%p520) target = $region60
        $region59: #{tpu_custom_call.1} parent=27 // pred_region
          %523 = dma.done [#allocation9], 16
        $region60: #{tpu_custom_call.1} parent=27 // pred_fallthru
          _
      $region28: #{tpu_custom_call.1} parent=5 // pred_fallthru
        _
      %p524 = scmp.le.s32.totalorder 2, %s16
      // Predicated region
      $region61: #{tpu_custom_call.1} parent=5 // pred_check
        %p525 = pneg %p524
      $region62: #{tpu_custom_call.1} parent=5 // pred_check_branch
        %527 = sbr.rel (%p525) target = $region64
      $region63: #{tpu_custom_call.1} parent=5 // pred_region
        %s528 = ssub.s32 %s16, 2
      $region64: #{tpu_custom_call.1} parent=5 // pred_fallthru
        _
    $region6: #{tpu_custom_call.1} parent=1 // loop_footer
      %s20 = sadd.s32 1, %s16
    $region7: #{tpu_custom_call.1} parent=1 // loop_footer_branch
      %15 = sbr.rel target = $region3
    $region8: #{tpu_custom_call.1} parent=1 // loop_exit
      _
    %529 = vsyncpa [#allocation3], 1
    %s530 = scalar_lea.sflag [#allocation3], 1
    %531 = vsyncpa %s530, 1
    %532 = vsyncpa [#allocation6], 1
    %s533 = scalar_lea.sflag [#allocation6], 1
    %534 = vsyncpa %s533, 1
    %535 = vsyncpa [#allocation4], 1
    %s536 = scalar_lea.sflag [#allocation4], 1
    %537 = vsyncpa %s536, 1
    %538 = vsyncpa [#allocation9], 1

</llo_original>
